<compile_context>
chip_gen: v7x
topology: tpu7x:2x2x1
jax: 0.10.0
libtpu: 0.0.40
codegen_flags: <defaults>
</compile_context>

<pallas_src>
import jax
import jax.numpy as jnp
from jax.experimental import pallas as pl
from jax.experimental.pallas import tpu as pltpu

M, K, N = 100, 50, 50   # shapes implied by the PyTorch module


def linear_add_kernel(x_ref, w_ref, b_ref, other_ref, o_ref):
    # One MXU pass, then fused bias-add + elementwise add on the VPU.
    acc = jnp.dot(x_ref[...], w_ref[...], preferred_element_type=jnp.float32)
    o_ref[...] = acc + b_ref[...] + other_ref[...]


@jax.jit
def linear_add(x, w_t, bias, other):
    vmem_spec = pl.BlockSpec(memory_space=pltpu.MemorySpace.VMEM)
    return pl.pallas_call(
        linear_add_kernel,
        out_shape=jax.ShapeDtypeStruct((M, N), jnp.float32),
        in_specs=[vmem_spec, vmem_spec, vmem_spec, vmem_spec],
        out_specs=vmem_spec,
        cost_estimate=pl.CostEstimate(
            flops=2 * M * K * N,
            transcendentals=0,
            bytes_accessed=(M * K + K * N + N + 2 * M * N) * 4,
        ),
    )(x, w_t, bias, other)


if __name__ == "__main__":
    key = jax.random.PRNGKey(0)
    k_x, k_other, k_w, k_b = jax.random.split(key, 4)

    # Inputs (deterministic stand-ins for torch.randn).
    x1 = jax.random.normal(k_x, (M, K), dtype=jnp.float32)
    other = jax.random.normal(k_other, (M, N), dtype=jnp.float32)

    # Deterministic Linear(50, 50) params, PyTorch-style uniform init.
    bound = 1.0 / (K ** 0.5)
    weight = jax.random.uniform(k_w, (N, K), minval=-bound, maxval=bound,
                                dtype=jnp.float32)  # PyTorch stores (out, in)
    bias = jax.random.uniform(k_b, (N,), minval=-bound, maxval=bound,
                              dtype=jnp.float32)

    w_t = weight.T                       # (K, N) so the kernel computes x @ W
    bias_2d = bias.reshape(1, N)         # 2-D for TPU-friendly broadcast layout

    out = linear_add(x1, w_t, bias_2d, other)
    jax.block_until_ready(out)

    # Reference check against plain JAX.
    ref = x1 @ w_t + bias_2d + other
    assert out.shape == (M, N)
    assert jnp.allclose(out, ref, atol=1e-5, rtol=1e-5)

    print("KERNEL_OK")
</pallas_src>

<mosaic_0001>
module attributes {stable_mosaic.version = 11 : i64} {
  func.func @linear_add_kernel(%arg0: memref<100x50xf32, #tpu.memory_space<vmem>>, %arg1: memref<50x50xf32, #tpu.memory_space<vmem>>, %arg2: memref<1x50xf32, #tpu.memory_space<vmem>>, %arg3: memref<100x50xf32, #tpu.memory_space<vmem>>, %arg4: memref<100x50xf32, #tpu.memory_space<vmem>>) attributes {dimension_semantics = [], scalar_prefetch = 0 : i64, scratch_operands = 0 : i64, tpu.core_type = #tpu.core_type<tc>} {
    %c0 = arith.constant 0 : index
    %c0_0 = arith.constant 0 : index
    %0 = vector.load %arg0[%c0, %c0_0] : memref<100x50xf32, #tpu.memory_space<vmem>>, vector<100x50xf32>
    %c0_1 = arith.constant 0 : index
    %c0_2 = arith.constant 0 : index
    %1 = vector.load %arg1[%c0_1, %c0_2] : memref<50x50xf32, #tpu.memory_space<vmem>>, vector<50x50xf32>
    %cst = arith.constant dense<0.000000e+00> : vector<100x50xf32>
    %2 = tpu.matmul %0, %1, %cst {dimension_numbers = #tpu.dot_dimension_numbers<[1], [0], [0], [1], [0, 0, 1, 1], [], []>} : vector<100x50xf32>, vector<50x50xf32>, vector<100x50xf32> -> vector<100x50xf32>
    %c0_3 = arith.constant 0 : index
    %c0_4 = arith.constant 0 : index
    %3 = vector.load %arg2[%c0_3, %c0_4] : memref<1x50xf32, #tpu.memory_space<vmem>>, vector<1x50xf32>
    %4 = vector.broadcast %3 : vector<1x50xf32> to vector<100x50xf32>
    %5 = arith.addf %2, %4 : vector<100x50xf32>
    %c0_5 = arith.constant 0 : index
    %c0_6 = arith.constant 0 : index
    %6 = vector.load %arg3[%c0_5, %c0_6] : memref<100x50xf32, #tpu.memory_space<vmem>>, vector<100x50xf32>
    %7 = arith.addf %5, %6 : vector<100x50xf32>
    %c0_7 = arith.constant 0 : index
    %c0_8 = arith.constant 0 : index
    %8 = vector.load %arg4[%c0_7, %c0_8] : memref<100x50xf32, #tpu.memory_space<vmem>>, vector<100x50xf32>
    tpu.vector_store %arg4[%c0_7, %c0_8], %7 {strides = array<i32>} : memref<100x50xf32, #tpu.memory_space<vmem>>, vector<100x50xf32>,
    return
  }
}

</mosaic_0001>

<llo_original>
// kernel: linear_add.1
$region0: #{linear_add.1}
  #allocation0 [shape = 'u32[]', space=smem, size = 0x4, offset = 0x4, fixed_abs, tag = 'smem constant byte address 0x4 - core index']
  #allocation1 [shape = 'u32[144,128]{1,0:T(1,128)}', space=vmem, size = 0x12000, scoped, tag = 'internal scratch']
  %s0 = inlined_call_operand.vmem [shape: f32[100,50], index: 0, kind: input, shape index: {}]
  %s1 = inlined_call_operand.vmem [shape: f32[50,50], index: 1, kind: input, shape index: {}]
  %s2 = inlined_call_operand.vmem [shape: f32[1,50], index: 2, kind: input, shape index: {}]
  %s3 = inlined_call_operand.vmem [shape: f32[100,50], index: 3, kind: input, shape index: {}]
  %s4 = inlined_call_operand.vmem [shape: f32[100,50], index: 4, kind: output, shape index: {}]
  %s5 = sld [smem:[#allocation0]]
  $region26: #{linear_add.1} parent=0
    _
  %s7 = ssub.s32 1, %s5
  %s8 = scalar_select 0, %s7, %s5
  // Predicated region
  $region2: #{linear_add.1} parent=0 // pred_check
    _
  $region3: #{linear_add.1} parent=0 // pred_check_branch
    %10 = sbr.rel (0) target = $region5
  $region4: #{linear_add.1} parent=0 // pred_region
    _
  $region5: #{linear_add.1} parent=0 // pred_fallthru
    _
  // Predicated region
  $region6: #{linear_add.1} parent=0 // pred_check
    _
  $region7: #{linear_add.1} parent=0 // pred_check_branch
    %12 = sbr.rel (0) target = $region9
  $region8: #{linear_add.1} parent=0 // pred_region
    _
  $region9: #{linear_add.1} parent=0 // pred_fallthru
    _
  // Predicated region
  $region10: #{linear_add.1} parent=0 // pred_check
    _
  $region11: #{linear_add.1} parent=0 // pred_check_branch
    %14 = sbr.rel (0) target = $region13
  $region12: #{linear_add.1} parent=0 // pred_region
    _
  $region13: #{linear_add.1} parent=0 // pred_fallthru
    _
  // Predicated region
  $region14: #{linear_add.1} parent=0 // pred_check
    _
  $region15: #{linear_add.1} parent=0 // pred_check_branch
    %16 = sbr.rel (0) target = $region17
  $region16: #{linear_add.1} parent=0 // pred_region
    _
  $region17: #{linear_add.1} parent=0 // pred_fallthru
    _
  %v17 = vld [vmem:[%s0] sm:$0xff]
  %v18 = vld [vmem:[%s0 + $0x8] sm:$0xff]
  %v19 = vld [vmem:[%s0 + $0x10] sm:$0xff]
  %v20 = vld [vmem:[%s0 + $0x18] sm:$0xff]
  %v21 = vld [vmem:[%s0 + $0x20] sm:$0xff]
  %v22 = vld [vmem:[%s0 + $0x28] sm:$0xff]
  %v23 = vld [vmem:[%s0 + $0x30] sm:$0xff]
  %v24 = vld [vmem:[%s0 + $0x38] sm:$0xff]
  %v25 = vld [vmem:[%s0 + $0x40] sm:$0xff]
  %v26 = vld [vmem:[%s0 + $0x48] sm:$0xff]
  %v27 = vld [vmem:[%s0 + $0x50] sm:$0xff]
  %v28 = vld [vmem:[%s0 + $0x58] sm:$0xff]
  %v29 = vld [vmem:[%s0 + $0x60] sm:$0xf]
  %v30 = vld [vmem:[%s1] sm:$0xff]
  %v31 = vld [vmem:[%s1 + $0x8] sm:$0xff]
  %v32 = vld [vmem:[%s1 + $0x10] sm:$0xff]
  %v33 = vld [vmem:[%s1 + $0x18] sm:$0xff]
  %v34 = vld [vmem:[%s1 + $0x20] sm:$0xff]
  %v35 = vld [vmem:[%s1 + $0x28] sm:$0xff]
  %v36 = vld [vmem:[%s1 + $0x30] sm:$0x3]
  %v37 = vld [vmem:[%s2] sm:$0x1]
  %v39 = vlaneseq
  %v40 = vshrl.u32 %v39, 7
  %v41 = vsub.s32 0, %v40
  %v42 = vrot.slane %v37, %v41
  %vm44 = vcmask 408576
  %v46 = vsel %vm44, %v17, 0
  %v49 = vsel %vm44, %v18, 0
  %v52 = vsel %vm44, %v19, 0
  %v55 = vsel %vm44, %v20, 0
  %v58 = vsel %vm44, %v21, 0
  %v61 = vsel %vm44, %v22, 0
  %v64 = vsel %vm44, %v23, 0
  %v67 = vsel %vm44, %v24, 0
  %v70 = vsel %vm44, %v25, 0
  %v73 = vsel %vm44, %v26, 0
  %v76 = vsel %vm44, %v27, 0
  %v79 = vsel %vm44, %v28, 0
  %v82 = vsel %vm44, %v29, 0
  %vm84 = vcmask 1041408
  %v86 = vsel %vm84, %v36, 0
  %88 = vmatprep.subr.mxu0 0.0
  %89 = vmatpush1.msra.mxu0 %v30
  %90 = vmatprep.subr.mxu0 0.0
  %91 = vmatpush1.msra.mxu0 %v31
  %92 = vmatprep.subr.mxu0 0.0
  %93 = vmatpush1.msra.mxu0 %v32
  %94 = vmatprep.subr.mxu0 0.0
  %95 = vmatpush1.msra.mxu0 %v33
  %96 = vmatprep.subr.mxu0 0.0
  %97 = vmatpush1.msra.mxu0 %v34
  %98 = vmatprep.subr.mxu0 0.0
  %99 = vmatpush1.msra.mxu0 %v35
  %100 = vmatprep.subr.mxu0 0.0
  %101 = vmatpush1.msra.mxu0 %v86
  %102 = vmatprep.subr.mxu0 0.0
  %103 = vmatpush1.msra.mxu0 0.0
  %104 = vmatprep.subr.mxu0 0.0
  %105 = vmatpush1.msra.mxu0 0.0
  %106 = vmatprep.subr.mxu0 0.0
  %107 = vmatpush1.msra.mxu0 0.0
  %108 = vmatprep.subr.mxu0 0.0
  %109 = vmatpush1.msra.mxu0 0.0
  %110 = vmatprep.subr.mxu0 0.0
  %111 = vmatpush1.msra.mxu0 0.0
  %112 = vmatprep.subr.mxu0 0.0
  %113 = vmatpush1.msra.mxu0 0.0
  %114 = vmatprep.subr.mxu0 0.0
  %115 = vmatpush1.msra.mxu0 0.0
  %116 = vmatprep.subr.mxu0 0.0
  %117 = vmatpush1.msra.mxu0 0.0
  %118 = vmatprep.subr.mxu0 0.0
  %119 = vmatpush1.msra.mxu0 0.0
  %120 = vmatprep.subr.mxu0 0.0
  %121 = vmatpush1.msra.mxu0 0.0
  %122 = vmatprep.subr.mxu0 0.0
  %123 = vmatpush1.msra.mxu0 0.0
  %124 = vmatprep.subr.mxu0 0.0
  %125 = vmatpush1.msra.mxu0 0.0
  %126 = vmatprep.subr.mxu0 0.0
  %127 = vmatpush1.msra.mxu0 0.0
  %128 = vmatprep.subr.mxu0 0.0
  %129 = vmatpush1.msra.mxu0 0.0
  %130 = vmatprep.subr.mxu0 0.0
  %131 = vmatpush1.msra.mxu0 0.0
  %132 = vmatprep.subr.mxu0 0.0
  %133 = vmatpush1.msra.mxu0 0.0
  %134 = vmatprep.subr.mxu0 0.0
  %135 = vmatpush1.msra.mxu0 0.0
  %136 = vmatprep.subr.mxu0 0.0
  %137 = vmatpush1.msra.mxu0 0.0
  %138 = vmatprep.subr.mxu0 0.0
  %139 = vmatpush1.msra.mxu0 0.0
  %140 = vmatprep.subr.mxu0 0.0
  %141 = vmatpush1.msra.mxu0 0.0
  %142 = vmatprep.subr.mxu0 0.0
  %143 = vmatpush1.msra.mxu0 0.0
  %144 = vmatprep.subr.mxu0 0.0
  %145 = vmatpush1.msra.mxu0 0.0
  %146 = vmatprep.subr.mxu0 0.0
  %147 = vmatpush1.msra.mxu0 0.0
  %148 = vmatprep.subr.mxu0 0.0
  %149 = vmatpush1.msra.mxu0 0.0
  %150 = vmatprep.subr.mxu0 0.0
  %151 = vmatpush1.msra.mxu0 0.0
  %152 = vmatprep.mubr.f32.mxu0 0.0
  %153 = vmatmul.mubr.f32.gmra.mrb[0].mxu0 %v46
  %v154 = vpop.f32.mrb[0].mxu0
  %v155 = vadd.f32 %v42, %v154
  %v156 = vpop.f32.mrb[0].mxu0
  %157 = vmatprep.mubr.f32.mxu0 0.0
  %158 = vmatmul.mubr.f32.gmra.mrb[0].mxu0 %v49
  %v159 = vpop.f32.mrb[0].mxu0
  %v160 = vadd.f32 %v42, %v159
  %v161 = vpop.f32.mrb[0].mxu0
  %162 = vmatprep.mubr.f32.mxu0 0.0
  %163 = vmatmul.mubr.f32.gmra.mrb[0].mxu0 %v52
  %v164 = vpop.f32.mrb[0].mxu0
  %v165 = vadd.f32 %v42, %v164
  %v166 = vpop.f32.mrb[0].mxu0
  %167 = vmatprep.mubr.f32.mxu0 0.0
  %168 = vmatmul.mubr.f32.gmra.mrb[0].mxu0 %v55
  %v169 = vpop.f32.mrb[0].mxu0
  %v170 = vadd.f32 %v42, %v169
  %v171 = vpop.f32.mrb[0].mxu0
  %172 = vmatprep.mubr.f32.mxu0 0.0
  %173 = vmatmul.mubr.f32.gmra.mrb[0].mxu0 %v58
  %v174 = vpop.f32.mrb[0].mxu0
  %v175 = vadd.f32 %v42, %v174
  %v176 = vpop.f32.mrb[0].mxu0
  %177 = vmatprep.mubr.f32.mxu0 0.0
  %178 = vmatmul.mubr.f32.gmra.mrb[0].mxu0 %v61
  %v179 = vpop.f32.mrb[0].mxu0
  %v180 = vadd.f32 %v42, %v179
  %v181 = vpop.f32.mrb[0].mxu0
  %182 = vmatprep.mubr.f32.mxu0 0.0
  %183 = vmatmul.mubr.f32.gmra.mrb[0].mxu0 %v64
  %v184 = vpop.f32.mrb[0].mxu0
  %v185 = vadd.f32 %v42, %v184
  %v186 = vpop.f32.mrb[0].mxu0
  %187 = vmatprep.mubr.f32.mxu0 0.0
  %188 = vmatmul.mubr.f32.gmra.mrb[0].mxu0 %v67
  %v189 = vpop.f32.mrb[0].mxu0
  %v190 = vadd.f32 %v42, %v189
  %v191 = vpop.f32.mrb[0].mxu0
  %192 = vmatprep.mubr.f32.mxu0 0.0
  %193 = vmatmul.mubr.f32.gmra.mrb[0].mxu0 %v70
  %v194 = vpop.f32.mrb[0].mxu0
  %v195 = vadd.f32 %v42, %v194
  %v196 = vpop.f32.mrb[0].mxu0
  %197 = vmatprep.mubr.f32.mxu0 0.0
  %198 = vmatmul.mubr.f32.gmra.mrb[0].mxu0 %v73
  %v199 = vpop.f32.mrb[0].mxu0
  %v200 = vadd.f32 %v42, %v199
  %v201 = vpop.f32.mrb[0].mxu0
  %202 = vmatprep.mubr.f32.mxu0 0.0
  %203 = vmatmul.mubr.f32.gmra.mrb[0].mxu0 %v76
  %v204 = vpop.f32.mrb[0].mxu0
  %v205 = vadd.f32 %v42, %v204
  %v206 = vpop.f32.mrb[0].mxu0
  %207 = vmatprep.mubr.f32.mxu0 0.0
  %208 = vmatmul.mubr.f32.gmra.mrb[0].mxu0 %v79
  %v209 = vpop.f32.mrb[0].mxu0
  %v210 = vadd.f32 %v42, %v209
  %v211 = vpop.f32.mrb[0].mxu0
  %212 = vmatprep.mubr.f32.mxu0 0.0
  %213 = vmatmul.mubr.f32.gmra.mrb[0].mxu0 %v82
  %v214 = vpop.f32.mrb[0].mxu0
  %v215 = vadd.f32 %v42, %v214
  %v216 = vpop.f32.mrb[0].mxu0
  %217 = vdwg.mxu0
  %v218 = vld [vmem:[%s3] sm:$0xff]
  %v219 = vld [vmem:[%s3 + $0x8] sm:$0xff]
  %v220 = vld [vmem:[%s3 + $0x10] sm:$0xff]
  %v221 = vld [vmem:[%s3 + $0x18] sm:$0xff]
  %v222 = vld [vmem:[%s3 + $0x20] sm:$0xff]
  %v223 = vld [vmem:[%s3 + $0x28] sm:$0xff]
  %v224 = vld [vmem:[%s3 + $0x30] sm:$0xff]
  %v225 = vld [vmem:[%s3 + $0x38] sm:$0xff]
  %v226 = vld [vmem:[%s3 + $0x40] sm:$0xff]
  %v227 = vld [vmem:[%s3 + $0x48] sm:$0xff]
  %v228 = vld [vmem:[%s3 + $0x50] sm:$0xff]
  %v229 = vld [vmem:[%s3 + $0x58] sm:$0xff]
  %v230 = vld [vmem:[%s3 + $0x60] sm:$0xf]
  %v231 = vadd.f32 %v155, %v218
  %v232 = vadd.f32 %v160, %v219
  %v233 = vadd.f32 %v165, %v220
  %v234 = vadd.f32 %v170, %v221
  %v235 = vadd.f32 %v175, %v222
  %v236 = vadd.f32 %v180, %v223
  %v237 = vadd.f32 %v185, %v224
  %v238 = vadd.f32 %v190, %v225
  %v239 = vadd.f32 %v195, %v226
  %v240 = vadd.f32 %v200, %v227
  %v241 = vadd.f32 %v205, %v228
  %v242 = vadd.f32 %v210, %v229
  %v243 = vadd.f32 %v215, %v230
  %244 = vst.msk [vmem:[%s4] sm:$0xff] %vm44, %v231
  %245 = vst.msk [vmem:[%s4 + $0x8] sm:$0xff] %vm44, %v232
  %246 = vst.msk [vmem:[%s4 + $0x10] sm:$0xff] %vm44, %v233
  %247 = vst.msk [vmem:[%s4 + $0x18] sm:$0xff] %vm44, %v234
  %248 = vst.msk [vmem:[%s4 + $0x20] sm:$0xff] %vm44, %v235
  %249 = vst.msk [vmem:[%s4 + $0x28] sm:$0xff] %vm44, %v236
  %250 = vst.msk [vmem:[%s4 + $0x30] sm:$0xff] %vm44, %v237
  %251 = vst.msk [vmem:[%s4 + $0x38] sm:$0xff] %vm44, %v238
  %252 = vst.msk [vmem:[%s4 + $0x40] sm:$0xff] %vm44, %v239
  %253 = vst.msk [vmem:[%s4 + $0x48] sm:$0xff] %vm44, %v240
  %254 = vst.msk [vmem:[%s4 + $0x50] sm:$0xff] %vm44, %v241
  %255 = vst.msk [vmem:[%s4 + $0x58] sm:$0xff] %vm44, %v242
  %vm256 = vcmask 404480
  %257 = vst.msk [vmem:[%s4 + $0x60] sm:$0xf] %vm256, %v243
  // Predicated region
  $region18: #{linear_add.1} parent=0 // pred_check
    _
  $region19: #{linear_add.1} parent=0 // pred_check_branch
    %259 = sbr.rel (0) target = $region21
  $region20: #{linear_add.1} parent=0 // pred_region
    _
  $region21: #{linear_add.1} parent=0 // pred_fallthru
    _
  // Predicated region
  $region22: #{linear_add.1} parent=0 // pred_check
    _
  $region23: #{linear_add.1} parent=0 // pred_check_branch
    %261 = sbr.rel (0) target = $region25
  $region24: #{linear_add.1} parent=0 // pred_region
    _
  $region25: #{linear_add.1} parent=0 // pred_fallthru
    _

</llo_original>
